<compile_context>
chip_gen: v6e
topology: v6e:2x2x1
jax: 0.10.0
libtpu: 0.0.40
codegen_flags: <defaults>
</compile_context>

<pallas_src>
import jax
import jax.numpy as jnp
from jax.experimental import pallas as pl
from jax.experimental.pallas import tpu as pltpu


def _round_up(x: int, m: int) -> int:
    return ((x + m - 1) // m) * m


def _num_tensorcores() -> int:
    """Best-effort TensorCores-per-chip guess (megacore parts get 2)."""
    try:
        kind = (getattr(jax.devices()[0], "device_kind", "") or "").lower()
        if any(tag in kind for tag in ("v7", "7x", "v4", "v5p")):
            return 2
    except Exception:
        pass
    return 1


def fusion_kernel(x_ref, wcat_ref, bcat_ref, wo_ref, bo_ref, out_ref):
    """One batch tile of the fused MLB-style forward pass.

    x_ref    : (TB, K_pad)   bf16/f32   concat(input_0, input_1), zero padded
    wcat_ref : (K_pad, 2M)   bf16/f32   block-diag(W0, W1)
    bcat_ref : (1, 2M)       f32        concat(b0, b1)
    wo_ref   : (M, O_pad)    bf16/f32
    bo_ref   : (1, O_pad)    f32
    out_ref  : (TB, O_pad)   out dtype
    """
    mm = wcat_ref.shape[1] // 2

    # _dual_linear: linear0 / linear1 (single block-diagonal MXU push) + relu.
    h = jnp.dot(x_ref[...], wcat_ref[...],
                preferred_element_type=jnp.float32) + bcat_ref[...]
    h = jnp.maximum(h, 0.0)
    h0 = h[:, :mm]
    h1 = h[:, mm:]

    # Elementwise fusion (MLB-style). s >= 0 because h0, h1 >= 0 after ReLU.
    s = h0 * h1

    # _norm_lin_out with normalize=True:
    #   signed sqrt: sqrt(relu(s)) - sqrt(relu(-s)) == sqrt(s)     (s >= 0)
    #   L2 normalize per row: sum(z*z) == sum(s), so one rsqrt suffices;
    #   max(norm, 1e-12) == sqrt(max(sum(s), 1e-24))  (sqrt monotone).
    # TODO(synk): this simplification assumes activ_input == 'relu' (s >= 0);
    #             a subclass with a signed input activation needs the full
    #             signed-sqrt form.
    inv_norm = jax.lax.rsqrt(
        jnp.maximum(jnp.sum(s, axis=-1, keepdims=True), 1e-24))
    z = jnp.sqrt(s) * inv_norm

    # linear_out + activ_output ('relu'); dropouts are identity in eval mode.
    o = jnp.dot(z.astype(wo_ref.dtype), wo_ref[...],
                preferred_element_type=jnp.float32) + bo_ref[...]
    out_ref[...] = jnp.maximum(o, 0.0).astype(out_ref.dtype)


def abstract_fusion_forward(x0, x1, w0, b0, w1, b1, wo, bo,
                            *, block_b: int = 128,
                            mxu_dtype=jnp.bfloat16,
                            out_dtype=None):
    B, D0 = x0.shape
    D1 = x1.shape[1]
    M = w0.shape[1]
    O = wo.shape[1]
    f32 = jnp.float32
    out_dtype = out_dtype if out_dtype is not None else x0.dtype

    # ---- feature padding (lane-dense LHS and output) -----------------------
    k_pad = _round_up(D0 + D1, 128)   # fused LHS feature dim
    o_pad = _round_up(O, 128)         # lane-dense unmasked stores

    # ---- batch tiling: minimize padding, generation aware ------------------
    n_cores = _num_tensorcores()
    # single-TC parts: collapse small/medium batches into one grid step
    eff_block_b = block_b if n_cores > 1 else max(block_b, 512)
    nsteps = pl.cdiv(B, eff_block_b)
    if n_cores > 1:
        # keep both TensorCores busy under dimension_semantics=('parallel',)
        nsteps = max(nsteps, min(n_cores, pl.cdiv(B, 8)))
    tb = _round_up(pl.cdiv(B, nsteps), 8)
    b_pad = nsteps * tb

    # ---- operand packing (wrapper-side, one-time) ---------------------------
    # Fused activation stream in the MXU dtype (bf16 halves HBM->VMEM bytes).
    x_cat = jnp.concatenate([x0, x1], axis=1)
    x_cat = jnp.pad(x_cat, ((0, b_pad - B),
                            (0, k_pad - (D0 + D1)))).astype(mxu_dtype)

    # Block-diagonal fused input weight and concatenated bias.
    w_cat = jnp.zeros((k_pad, 2 * M), dtype=f32)
    w_cat = w_cat.at[:D0, :M].set(w0.astype(f32))
    w_cat = w_cat.at[D0:D0 + D1, M:].set(w1.astype(f32))
    w_cat = w_cat.astype(mxu_dtype)
    b_cat = jnp.concatenate([b0.reshape(1, M).astype(f32),
                             b1.reshape(1, M).astype(f32)], axis=1)

    wop = jnp.pad(wo, ((0, 0), (0, o_pad - O))).astype(mxu_dtype)
    bop = jnp.pad(bo.reshape(1, O).astype(f32), ((0, 0), (0, o_pad - O)))

    # ---- specs --------------------------------------------------------------
    row_map = lambda i: (i, 0)     # stream activation / output rows
    fixed_map = lambda i: (0, 0)   # weights & biases stay VMEM-resident

    grid = (nsteps,)

    act_isz = jnp.dtype(mxu_dtype).itemsize
    out_isz = jnp.dtype(out_dtype).itemsize
    weight_bytes = (k_pad * 2 * M + M * o_pad) * act_isz + (2 * M + o_pad) * 4
    tile_bytes = 2 * tb * (k_pad * act_isz + o_pad * out_isz)  # 2x-buffered
    # v7x has only 64 MiB VMEM per TensorCore -> never ask for more than 32 MiB.
    vmem_limit = int(max(8 << 20,
                         min(32 << 20, weight_bytes + tile_bytes + (4 << 20))))

    cost = pl.CostEstimate(
        flops=2 * b_pad * (k_pad * 2 * M + M * o_pad) + 6 * b_pad * M,
        transcendentals=b_pad * (M + 1),
        bytes_accessed=(b_pad * k_pad * act_isz       # streamed activations
                        + weight_bytes                # resident operands
                        + b_pad * o_pad * out_isz),   # output writeback
    )

    out = pl.pallas_call(
        fusion_kernel,
        out_shape=jax.ShapeDtypeStruct((b_pad, o_pad), out_dtype),
        grid=grid,
        in_specs=[
            pl.BlockSpec((tb, k_pad), row_map),        # fused activations
            pl.BlockSpec((k_pad, 2 * M), fixed_map),   # block-diag W0|W1
            pl.BlockSpec((1, 2 * M), fixed_map),       # b0|b1
            pl.BlockSpec((M, o_pad), fixed_map),       # W_out
            pl.BlockSpec((1, o_pad), fixed_map),       # b_out
        ],
        out_specs=pl.BlockSpec((tb, o_pad), row_map),
        compiler_params=pltpu.CompilerParams(
            dimension_semantics=("parallel",),
            vmem_limit_bytes=vmem_limit,
        ),
        cost_estimate=cost,
    )(x_cat, w_cat, b_cat, wop, bop)

    return out[:B, :O]


def _reference(x0, x1, w0, b0, w1, b1, wo, bo):
    h0 = jnp.maximum(x0 @ w0 + b0, 0.0)
    h1 = jnp.maximum(x1 @ w1 + b1, 0.0)
    z = h0 * h1
    z = jnp.sqrt(jnp.maximum(z, 0.0)) - jnp.sqrt(jnp.maximum(-z, 0.0))
    z = z / jnp.maximum(jnp.sqrt(jnp.sum(z * z, -1, keepdims=True)), 1e-12)
    return jnp.maximum(z @ wo + bo, 0.0)


if __name__ == "__main__":
    # Shapes consistent with the module:
    #   input_dims = (32, 48), mm_dim = 128, output_dim = 64, batch = 200
    # (batch 200 exercises tile selection / padding on both 1-TC and 2-TC parts).
    B, D0, D1, M, O = 200, 32, 48, 128, 64

    key = jax.random.PRNGKey(0)
    k = jax.random.split(key, 8)
    x0 = jax.random.normal(k[0], (B, D0), jnp.float32)
    x1 = jax.random.normal(k[1], (B, D1), jnp.float32)
    w0 = jax.random.normal(k[2], (D0, M), jnp.float32) * 0.05
    b0 = jax.random.normal(k[3], (1, M), jnp.float32) * 0.05
    w1 = jax.random.normal(k[4], (D1, M), jnp.float32) * 0.05
    b1 = jax.random.normal(k[5], (1, M), jnp.float32) * 0.05
    wo = jax.random.normal(k[6], (M, O), jnp.float32) * 0.05
    bo = jax.random.normal(k[7], (1, O), jnp.float32) * 0.05

    ref = _reference(x0, x1, w0, b0, w1, b1, wo, bo)

    # Default path: bf16 MXU operands / bf16 activation stream, f32 accumulate.
    out_bf16 = abstract_fusion_forward(x0, x1, w0, b0, w1, b1, wo, bo)
    out_bf16 = jax.block_until_ready(out_bf16)
    assert out_bf16.shape == (B, O)
    assert jnp.allclose(out_bf16.astype(jnp.float32), ref, atol=3e-2, rtol=3e-2)

    # f32 MXU path (higher precision, slower).
    out_f32 = abstract_fusion_forward(x0, x1, w0, b0, w1, b1, wo, bo,
                                      mxu_dtype=jnp.float32)
    out_f32 = jax.block_until_ready(out_f32)
    assert out_f32.shape == (B, O)
    assert jnp.allclose(out_f32, ref, atol=3e-2, rtol=3e-2)

    print("KERNEL_OK")
</pallas_src>

<mosaic_0001>
module attributes {stable_mosaic.version = 11 : i64} {
  func.func @fusion_kernel(%arg0: i32, %arg1: memref<200x128xbf16, #tpu.memory_space<vmem>>, %arg2: memref<128x256xbf16, #tpu.memory_space<vmem>>, %arg3: memref<1x256xf32, #tpu.memory_space<vmem>>, %arg4: memref<128x128xbf16, #tpu.memory_space<vmem>>, %arg5: memref<1x128xf32, #tpu.memory_space<vmem>>, %arg6: memref<200x128xf32, #tpu.memory_space<vmem>>) attributes {dimension_semantics = [#tpu.dimension_semantics<parallel>], iteration_bounds = array<i64: 1>, scalar_prefetch = 0 : i64, scratch_operands = 0 : i64, tpu.core_type = #tpu.core_type<tc>, window_params = [{transform_indices = @transform_0, window_bounds = array<i64: 200, 128>}, {pipeline_mode = #tpu.pipeline_mode<synchronous>, transform_indices = @transform_1, window_bounds = array<i64: 128, 256>}, {pipeline_mode = #tpu.pipeline_mode<synchronous>, transform_indices = @transform_2, window_bounds = array<i64: 1, 256>}, {pipeline_mode = #tpu.pipeline_mode<synchronous>, transform_indices = @transform_3, window_bounds = array<i64: 128, 128>}, {pipeline_mode = #tpu.pipeline_mode<synchronous>, transform_indices = @transform_4, window_bounds = array<i64: 1, 128>}, {transform_indices = @transform_5, window_bounds = array<i64: 200, 128>}]} {
    %c0 = arith.constant 0 : index
    %c0_0 = arith.constant 0 : index
    %0 = vector.load %arg1[%c0, %c0_0] : memref<200x128xbf16, #tpu.memory_space<vmem>>, vector<200x128xbf16>
    %c0_1 = arith.constant 0 : index
    %c0_2 = arith.constant 0 : index
    %1 = vector.load %arg2[%c0_1, %c0_2] : memref<128x256xbf16, #tpu.memory_space<vmem>>, vector<128x256xbf16>
    %cst = arith.constant dense<0.000000e+00> : vector<200x256xf32>
    %2 = tpu.matmul %0, %1, %cst {dimension_numbers = #tpu.dot_dimension_numbers<[1], [0], [0], [1], [0, 0, 1, 1], [], []>} : vector<200x128xbf16>, vector<128x256xbf16>, vector<200x256xf32> -> vector<200x256xf32>
    %c0_3 = arith.constant 0 : index
    %c0_4 = arith.constant 0 : index
    %3 = vector.load %arg3[%c0_3, %c0_4] : memref<1x256xf32, #tpu.memory_space<vmem>>, vector<1x256xf32>
    %4 = vector.broadcast %3 : vector<1x256xf32> to vector<200x256xf32>
    %5 = arith.addf %2, %4 : vector<200x256xf32>
    %cst_5 = arith.constant 0.000000e+00 : f32
    %6 = vector.broadcast %cst_5 : f32 to vector<200x256xf32>
    %7 = arith.maximumf %5, %6 : vector<200x256xf32>
    %8 = vector.extract_strided_slice %7 {offsets = [0, 0], sizes = [200, 128], strides = [1, 1]} : vector<200x256xf32> to vector<200x128xf32>
    %9 = vector.extract_strided_slice %7 {offsets = [0, 128], sizes = [200, 128], strides = [1, 1]} : vector<200x256xf32> to vector<200x128xf32>
    %10 = arith.mulf %8, %9 : vector<200x128xf32>
    %cst_6 = arith.constant dense<0.000000e+00> : vector<200xf32>
    %11 = vector.multi_reduction <add>, %10, %cst_6 [1] : vector<200x128xf32> to vector<200xf32>
    %12 = vector.shape_cast %11 : vector<200xf32> to vector<200x1xf32>
    %cst_7 = arith.constant 1.000000e-24 : f32
    %13 = vector.broadcast %cst_7 : f32 to vector<200x1xf32>
    %14 = arith.maximumf %12, %13 : vector<200x1xf32>
    %15 = math.rsqrt %14 : vector<200x1xf32>
    %16 = math.sqrt %10 : vector<200x128xf32>
    %17 = vector.broadcast %15 : vector<200x1xf32> to vector<200x128xf32>
    %18 = arith.mulf %16, %17 : vector<200x128xf32>
    %19 = arith.truncf %18 : vector<200x128xf32> to vector<200x128xbf16>
    %c0_8 = arith.constant 0 : index
    %c0_9 = arith.constant 0 : index
    %20 = vector.load %arg4[%c0_8, %c0_9] : memref<128x128xbf16, #tpu.memory_space<vmem>>, vector<128x128xbf16>
    %cst_10 = arith.constant dense<0.000000e+00> : vector<200x128xf32>
    %21 = tpu.matmul %19, %20, %cst_10 {dimension_numbers = #tpu.dot_dimension_numbers<[1], [0], [0], [1], [0, 0, 1, 1], [], []>} : vector<200x128xbf16>, vector<128x128xbf16>, vector<200x128xf32> -> vector<200x128xf32>
    %c0_11 = arith.constant 0 : index
    %c0_12 = arith.constant 0 : index
    %22 = vector.load %arg5[%c0_11, %c0_12] : memref<1x128xf32, #tpu.memory_space<vmem>>, vector<1x128xf32>
    %23 = vector.broadcast %22 : vector<1x128xf32> to vector<200x128xf32>
    %24 = arith.addf %21, %23 : vector<200x128xf32>
    %cst_13 = arith.constant 0.000000e+00 : f32
    %25 = vector.broadcast %cst_13 : f32 to vector<200x128xf32>
    %26 = arith.maximumf %24, %25 : vector<200x128xf32>
    %c0_14 = arith.constant 0 : index
    %c0_15 = arith.constant 0 : index
    %27 = vector.load %arg6[%c0_14, %c0_15] : memref<200x128xf32, #tpu.memory_space<vmem>>, vector<200x128xf32>
    tpu.vector_store %arg6[%c0_14, %c0_15], %26 {strides = array<i32>} : memref<200x128xf32, #tpu.memory_space<vmem>>, vector<200x128xf32>,
    return
  }
  func.func @transform_0(%arg0: i32) -> (i32, i32) {
    %c0_i32 = arith.constant 0 : i32
    %c0_i32_0 = arith.constant 0 : i32
    return %arg0, %c0_i32 : i32, i32
  }
  func.func @transform_1(%arg0: i32) -> (i32, i32) {
    %c0_i32 = arith.constant 0 : i32
    %c0_i32_0 = arith.constant 0 : i32
    %c0_i32_1 = arith.constant 0 : i32
    return %c0_i32, %c0_i32_0 : i32, i32
  }
  func.func @transform_2(%arg0: i32) -> (i32, i32) {
    %c0_i32 = arith.constant 0 : i32
    %c0_i32_0 = arith.constant 0 : i32
    %c0_i32_1 = arith.constant 0 : i32
    return %c0_i32, %c0_i32_0 : i32, i32
  }
  func.func @transform_3(%arg0: i32) -> (i32, i32) {
    %c0_i32 = arith.constant 0 : i32
    %c0_i32_0 = arith.constant 0 : i32
    %c0_i32_1 = arith.constant 0 : i32
    return %c0_i32, %c0_i32_0 : i32, i32
  }
  func.func @transform_4(%arg0: i32) -> (i32, i32) {
    %c0_i32 = arith.constant 0 : i32
    %c0_i32_0 = arith.constant 0 : i32
    %c0_i32_1 = arith.constant 0 : i32
    return %c0_i32, %c0_i32_0 : i32, i32
  }
  func.func @transform_5(%arg0: i32) -> (i32, i32) {
    %c0_i32 = arith.constant 0 : i32
    %c0_i32_0 = arith.constant 0 : i32
    return %arg0, %c0_i32 : i32, i32
  }
}

</mosaic_0001>

<llo_original>
// kernel: tpu_custom_call.1
$region0: #{tpu_custom_call.1}
  #allocation0 [shape = 'u32[]', space=smem, size = 0x4, offset = 0x4, fixed_abs, tag = 'smem constant byte address 0x4 - core index']
  #allocation1 [shape = 'u32[144,128]{1,0:T(1,128)}', space=vmem, size = 0x12000, scoped, tag = 'internal scratch']
  %s0 = inlined_call_operand.hbm [shape: bf16[200,128], index: 0, kind: input, shape index: {}]
  %s1 = inlined_call_operand.hbm [shape: bf16[128,256], index: 1, kind: input, shape index: {}]
  %s2 = inlined_call_operand.vmem [shape: f32[1,256], index: 2, kind: input, shape index: {}]
  %s3 = inlined_call_operand.hbm [shape: bf16[128,128], index: 3, kind: input, shape index: {}]
  %s4 = inlined_call_operand.vmem [shape: f32[1,128], index: 4, kind: input, shape index: {}]
  %s5 = inlined_call_operand.hbm [shape: f32[200,128], index: 5, kind: output, shape index: {}]
  %s6 = sld [smem:[#allocation0]]
  $region42: #{tpu_custom_call.1} parent=0
    _
  %s8 = ssub.s32 1, %s6
  %s9 = scalar_select 0, %s8, %s6
  $region1: #{tpu_custom_call.1} parent=0
    #allocation2 [shape = 'u8[51200]{0}', space=vmem, size = 0xc800, scoped, tag = 'input window, operand 0, single buffered']
    #allocation3 [shape = 's32[1]{0}', space=sflag, size = 0x4, scoped, tag = 'scoped memory for tpu_custom_call.1']
    #allocation4 [shape = 's32[1]{0}', space=sflag, size = 0x4, scoped, tag = 'scoped memory for tpu_custom_call.1']
    #allocation5 [shape = 'u8[65536]{0}', space=vmem, size = 0x10000, scoped, tag = 'input window, operand 1, single buffered']
    #allocation6 [shape = 's32[1]{0}', space=sflag, size = 0x4, scoped, tag = 'scoped memory for tpu_custom_call.1']
    #allocation7 [shape = 'u8[32768]{0}', space=vmem, size = 0x8000, scoped, tag = 'input window, operand 3, single buffered']
    #allocation8 [shape = 'u8[102400]{0}', space=vmem, size = 0x19000, scoped, tag = 'output window, operand 0, single buffered']
    %10 = vsyncpa [#allocation3], 0
    %11 = vsyncpa [#allocation6], 0
    %12 = vsyncpa [#allocation4], 0
    // Predicated region
    $region2: #{tpu_custom_call.1} parent=1 // pred_check
      _
    $region3: #{tpu_custom_call.1} parent=1 // pred_check_branch
      %14 = sbr.rel (0) target = $region5
    $region4: #{tpu_custom_call.1} parent=1 // pred_region
      %s16 = ssub.s32 1600, 1600
      %17 = vsyncadd [#allocation3], %s16
      %s18 = sshll.u32 [#allocation2], 4
      %s19 = int_to_ptr.vmem [resolvable:$true] %s18
      %24 = dma.hbm_to_vmem [thread:$0]  %s0, 1600, %s19, [#allocation3], 64, 64, 4
    $region5: #{tpu_custom_call.1} parent=1 // pred_fallthru
      _
    // Predicated region
    $region6: #{tpu_custom_call.1} parent=1 // pred_check
      _
    $region7: #{tpu_custom_call.1} parent=1 // pred_check_branch
      %26 = sbr.rel (0) target = $region9
    $region8: #{tpu_custom_call.1} parent=1 // pred_region
      %s28 = ssub.s32 2048, 2048
      %29 = vsyncadd [#allocation6], %s28
      %s30 = sshll.u32 [#allocation5], 4
      %s31 = int_to_ptr.vmem [resolvable:$true] %s30
      %36 = dma.hbm_to_vmem [thread:$0]  %s1, 2048, %s31, [#allocation6], 128, 128, 8
    $region9: #{tpu_custom_call.1} parent=1 // pred_fallthru
      _
    // Predicated region
    $region10: #{tpu_custom_call.1} parent=1 // pred_check
      _
    $region11: #{tpu_custom_call.1} parent=1 // pred_check_branch
      %38 = sbr.rel (0) target = $region13
    $region12: #{tpu_custom_call.1} parent=1 // pred_region
      _
    $region13: #{tpu_custom_call.1} parent=1 // pred_fallthru
      _
    // Predicated region
    $region14: #{tpu_custom_call.1} parent=1 // pred_check
      _
    $region15: #{tpu_custom_call.1} parent=1 // pred_check_branch
      %40 = sbr.rel (0) target = $region17
    $region16: #{tpu_custom_call.1} parent=1 // pred_region
      %s42 = ssub.s32 1024, 1024
      %43 = vsyncadd [#allocation6], %s42
      %s44 = sshll.u32 [#allocation7], 4
      %s45 = int_to_ptr.vmem [resolvable:$true] %s44
      %50 = dma.hbm_to_vmem [thread:$0]  %s3, 1024, %s45, [#allocation6], 64, 64, 4
    $region17: #{tpu_custom_call.1} parent=1 // pred_fallthru
      _
    // Predicated region
    $region18: #{tpu_custom_call.1} parent=1 // pred_check
      _
    $region19: #{tpu_custom_call.1} parent=1 // pred_check_branch
      %52 = sbr.rel (0) target = $region21
    $region20: #{tpu_custom_call.1} parent=1 // pred_region
      _
    $region21: #{tpu_custom_call.1} parent=1 // pred_fallthru
      _
    // Predicated region
    $region22: #{tpu_custom_call.1} parent=1 // pred_check
      _
    $region23: #{tpu_custom_call.1} parent=1 // pred_check_branch
      %54 = sbr.rel (0) target = $region25
    $region24: #{tpu_custom_call.1} parent=1 // pred_region
      %55 = dma.done [#allocation3], 1600
    $region25: #{tpu_custom_call.1} parent=1 // pred_fallthru
      _
    // Predicated region
    $region26: #{tpu_custom_call.1} parent=1 // pred_check
      _
    $region27: #{tpu_custom_call.1} parent=1 // pred_check_branch
      %57 = sbr.rel (0) target = $region29
    $region28: #{tpu_custom_call.1} parent=1 // pred_region
      %58 = dma.done [#allocation6], 2048
    $region29: #{tpu_custom_call.1} parent=1 // pred_fallthru
      _
    // Predicated region
    $region30: #{tpu_custom_call.1} parent=1 // pred_check
      _
    $region31: #{tpu_custom_call.1} parent=1 // pred_check_branch
      %60 = sbr.rel (0) target = $region33
    $region32: #{tpu_custom_call.1} parent=1 // pred_region
      %61 = dma.done [#allocation6], 1024
    $region33: #{tpu_custom_call.1} parent=1 // pred_fallthru
      _
    %v63 = vld [vmem:[#allocation2] sm:$0xf]
    %v64 = vld [vmem:[#allocation2 + $0x4] sm:$0xf]
    %v65 = vld [vmem:[#allocation2 + $0x8] sm:$0xf]
    %v66 = vld [vmem:[#allocation2 + $0xc] sm:$0xf]
    %v67 = vld [vmem:[#allocation2 + $0x10] sm:$0xf]
    %v68 = vld [vmem:[#allocation2 + $0x14] sm:$0xf]
    %v69 = vld [vmem:[#allocation2 + $0x18] sm:$0xf]
    %v70 = vld [vmem:[#allocation2 + $0x1c] sm:$0xf]
    %v71 = vld [vmem:[#allocation2 + $0x20] sm:$0xf]
    %v72 = vld [vmem:[#allocation2 + $0x24] sm:$0xf]
    %v73 = vld [vmem:[#allocation2 + $0x28] sm:$0xf]
    %v74 = vld [vmem:[#allocation2 + $0x2c] sm:$0xf]
    %v75 = vld [vmem:[#allocation2 + $0x30] sm:$0xf]
    %v76 = vld [vmem:[#allocation2 + $0x34] sm:$0xf]
    %v77 = vld [vmem:[#allocation2 + $0x38] sm:$0xf]
    %v78 = vld [vmem:[#allocation2 + $0x3c] sm:$0xf]
    %v79 = vld [vmem:[#allocation2 + $0x40] sm:$0xf]
    %v80 = vld [vmem:[#allocation2 + $0x44] sm:$0xf]
    %v81 = vld [vmem:[#allocation2 + $0x48] sm:$0xf]
    %v82 = vld [vmem:[#allocation2 + $0x4c] sm:$0xf]
    %v83 = vld [vmem:[#allocation2 + $0x50] sm:$0xf]
    %v84 = vld [vmem:[#allocation2 + $0x54] sm:$0xf]
    %v85 = vld [vmem:[#allocation2 + $0x58] sm:$0xf]
    %v86 = vld [vmem:[#allocation2 + $0x5c] sm:$0xf]
    %v87 = vld [vmem:[#allocation2 + $0x60] sm:$0xf]
    %v88 = vld [vmem:[#allocation5] sm:$0xff]
    %v89 = vld [vmem:[#allocation5 + $0x8] sm:$0xff]
    %v90 = vld [vmem:[#allocation5 + $0x10] sm:$0xff]
    %v91 = vld [vmem:[#allocation5 + $0x18] sm:$0xff]
    %v92 = vld [vmem:[#allocation5 + $0x20] sm:$0xff]
    %v93 = vld [vmem:[#allocation5 + $0x28] sm:$0xff]
    %v94 = vld [vmem:[#allocation5 + $0x30] sm:$0xff]
    %v95 = vld [vmem:[#allocation5 + $0x38] sm:$0xff]
    %v96 = vld [vmem:[#allocation5 + $0x40] sm:$0xff]
    %v97 = vld [vmem:[#allocation5 + $0x48] sm:$0xff]
    %v98 = vld [vmem:[#allocation5 + $0x50] sm:$0xff]
    %v99 = vld [vmem:[#allocation5 + $0x58] sm:$0xff]
    %v100 = vld [vmem:[#allocation5 + $0x60] sm:$0xff]
    %v101 = vld [vmem:[#allocation5 + $0x68] sm:$0xff]
    %v102 = vld [vmem:[#allocation5 + $0x70] sm:$0xff]
    %v103 = vld [vmem:[#allocation5 + $0x78] sm:$0xff]
    %v104 = vld [vmem:[%s2] sm:$0x3]
    %v106 = vlaneseq
    %v107 = vshrl.u32 %v106, 7
    %v108 = vsub.s32 0, %v107
    %v109 = vrot.slane %v104, %v108
    %v110 = vlaneseq
    %v111 = vshrl.u32 %v110, 7
    %v112 = vsub.s32 1, %v111
    %v113 = vrot.slane %v104, %v112
    %v141 = vunpack.c.l.b16 %v63
    %v142 = vunpack.c.l.b16 %v64
    %v143 = vunpack.c.l.b16 %v65
    %v144 = vunpack.c.l.b16 %v66
    %v145 = vunpack.c.l.b16 %v67
    %v146 = vunpack.c.l.b16 %v68
    %v147 = vunpack.c.l.b16 %v69
    %v148 = vunpack.c.l.b16 %v70
    %v149 = vunpack.c.l.b16 %v71
    %v150 = vunpack.c.l.b16 %v72
    %v151 = vunpack.c.l.b16 %v73
    %v152 = vunpack.c.l.b16 %v74
    %v153 = vunpack.c.l.b16 %v75
    %v154 = vunpack.c.l.b16 %v76
    %v155 = vunpack.c.l.b16 %v77
    %v156 = vunpack.c.l.b16 %v78
    %v157 = vunpack.c.l.b16 %v79
    %v158 = vunpack.c.l.b16 %v80
    %v159 = vunpack.c.l.b16 %v81
    %v160 = vunpack.c.l.b16 %v82
    %v161 = vunpack.c.l.b16 %v83
    %v162 = vunpack.c.l.b16 %v84
    %v163 = vunpack.c.l.b16 %v85
    %v164 = vunpack.c.l.b16 %v86
    %v165 = vunpack.c.l.b16 %v87
    %v166 = vpack.c.b16 %v142, %v141
    %v167 = vpack.c.b16 %v144, %v143
    %v168 = vpack.c.b16 %v146, %v145
    %v169 = vpack.c.b16 %v148, %v147
    %v170 = vpack.c.b16 %v150, %v149
    %v171 = vpack.c.b16 %v152, %v151
    %v172 = vpack.c.b16 %v154, %v153
    %v173 = vpack.c.b16 %v156, %v155
    %v174 = vpack.c.b16 %v158, %v157
    %v175 = vpack.c.b16 %v160, %v159
    %v176 = vpack.c.b16 %v162, %v161
    %v177 = vpack.c.b16 %v164, %v163
    %v178 = vpack.c.b16 %v165, %v165
    %v208 = vunpack.c.l.b16 %v88
    %v209 = vunpack.c.h.b16 %v88
    %v210 = vunpack.c.l.b16 %v89
    %v211 = vunpack.c.h.b16 %v89
    %v212 = vunpack.c.l.b16 %v90
    %v213 = vunpack.c.h.b16 %v90
    %v214 = vunpack.c.l.b16 %v91
    %v215 = vunpack.c.h.b16 %v91
    %v216 = vunpack.c.l.b16 %v92
    %v217 = vunpack.c.h.b16 %v92
    %v218 = vunpack.c.l.b16 %v93
    %v219 = vunpack.c.h.b16 %v93
    %v220 = vunpack.c.l.b16 %v94
    %v221 = vunpack.c.h.b16 %v94
    %v222 = vunpack.c.l.b16 %v95
    %v223 = vunpack.c.h.b16 %v95
    %v224 = vunpack.c.l.b16 %v96
    %v225 = vunpack.c.h.b16 %v96
    %v226 = vunpack.c.l.b16 %v97
    %v227 = vunpack.c.h.b16 %v97
    %v228 = vunpack.c.l.b16 %v98
    %v229 = vunpack.c.h.b16 %v98
    %v230 = vunpack.c.l.b16 %v99
    %v231 = vunpack.c.h.b16 %v99
    %v232 = vunpack.c.l.b16 %v100
    %v233 = vunpack.c.h.b16 %v100
    %v234 = vunpack.c.l.b16 %v101
    %v235 = vunpack.c.h.b16 %v101
    %v236 = vunpack.c.l.b16 %v102
    %v237 = vunpack.c.h.b16 %v102
    %v238 = vunpack.c.l.b16 %v103
    %v239 = vunpack.c.h.b16 %v103
    %v240 = vpack.c.b16 %v210, %v208
    %v241 = vpack.c.b16 %v211, %v209
    %v242 = vpack.c.b16 %v214, %v212
    %v243 = vpack.c.b16 %v215, %v213
    %v244 = vpack.c.b16 %v218, %v216
    %v245 = vpack.c.b16 %v219, %v217
    %v246 = vpack.c.b16 %v222, %v220
    %v247 = vpack.c.b16 %v223, %v221
    %v248 = vpack.c.b16 %v226, %v224
    %v249 = vpack.c.b16 %v227, %v225
    %v250 = vpack.c.b16 %v230, %v228
    %v251 = vpack.c.b16 %v231, %v229
    %v252 = vpack.c.b16 %v234, %v232
    %v253 = vpack.c.b16 %v235, %v233
    %v254 = vpack.c.b16 %v238, %v236
    %v255 = vpack.c.b16 %v239, %v237
    %272 = vmatprep.subr.bf16.mxu0 %v255
    %273 = vmatpush1.bf16.msra.mxu0 %v254
    %274 = vmatprep.subr.bf16.mxu0 %v253
    %275 = vmatpush1.bf16.msra.mxu0 %v252
    %276 = vmatprep.subr.bf16.mxu0 %v251
    %277 = vmatpush1.bf16.msra.mxu0 %v250
    %278 = vmatprep.subr.bf16.mxu0 %v249
    %279 = vmatpush1.bf16.msra.mxu0 %v248
    %280 = vmatprep.subr.bf16.mxu0 %v247
    %281 = vmatpush1.bf16.msra.mxu0 %v246
    %282 = vmatprep.subr.bf16.mxu0 %v245
    %283 = vmatpush1.bf16.msra.mxu0 %v244
    %284 = vmatprep.subr.bf16.mxu0 %v243
    %285 = vmatpush1.bf16.msra.mxu0 %v242
    %286 = vmatprep.subr.bf16.mxu0 %v241
    %287 = vmatpush1.bf16.msra.mxu0 %v240
    %288 = vmatprep.subr.bf16.mxu0 0
    %289 = vmatpush2.bf16.msra.mxu0 0
    %290 = vmatprep.subr.bf16.mxu0 0
    %291 = vmatpush2.bf16.msra.mxu0 0
    %292 = vmatprep.subr.bf16.mxu0 0
    %293 = vmatpush2.bf16.msra.mxu0 0
    %294 = vmatprep.subr.bf16.mxu0 0
    %295 = vmatpush2.bf16.msra.mxu0 0
    %296 = vmatprep.subr.bf16.mxu0 0
    %297 = vmatpush2.bf16.msra.mxu0 0
    %298 = vmatprep.subr.bf16.mxu0 0
    %299 = vmatpush2.bf16.msra.mxu0 0
    %300 = vmatprep.subr.bf16.mxu0 0
    %301 = vmatpush2.bf16.msra.mxu0 0
    %302 = vmatprep.subr.bf16.mxu0 0
    %303 = vmatpush2.bf16.msra.mxu0 0
    %304 = vmatprep.mubr.bf16.mxu0 0
    %305 = vmatmul.mubr.bf16.gmra.mxu0 %v166
    %v306 = vpop.f32.mrf.mxu0
    %v307 = vadd.f32 %v109, %v306
    %v308 = vpop.f32.mrf.mxu0
    %v309 = vadd.f32 %v113, %v308
    %v310 = vpop.f32.mrf.mxu0
    %v311 = vadd.f32 %v109, %v310
    %v312 = vpop.f32.mrf.mxu0
    %v313 = vadd.f32 %v113, %v312
    %314 = vmatprep.mubr.bf16.mxu0 0
    %315 = vmatmul.mubr.bf16.gmra.mxu0 %v167
    %v316 = vpop.f32.mrf.mxu0
    %v317 = vadd.f32 %v109, %v316
    %v318 = vpop.f32.mrf.mxu0
    %v319 = vadd.f32 %v113, %v318
    %v320 = vpop.f32.mrf.mxu0
    %v321 = vadd.f32 %v109, %v320
    %v322 = vpop.f32.mrf.mxu0
    %v323 = vadd.f32 %v113, %v322
    %324 = vmatprep.mubr.bf16.mxu0 0
    %325 = vmatmul.mubr.bf16.gmra.mxu0 %v168
    %v326 = vpop.f32.mrf.mxu0
    %v327 = vadd.f32 %v109, %v326
    %v328 = vpop.f32.mrf.mxu0
    %v329 = vadd.f32 %v113, %v328
    %v330 = vpop.f32.mrf.mxu0
    %v331 = vadd.f32 %v109, %v330
    %v332 = vpop.f32.mrf.mxu0
    %v333 = vadd.f32 %v113, %v332
    %334 = vmatprep.mubr.bf16.mxu0 0
    %335 = vmatmul.mubr.bf16.gmra.mxu0 %v169
    %v336 = vpop.f32.mrf.mxu0
    %v337 = vadd.f32 %v109, %v336
    %v338 = vpop.f32.mrf.mxu0
    %v339 = vadd.f32 %v113, %v338
    %v340 = vpop.f32.mrf.mxu0
    %v341 = vadd.f32 %v109, %v340
    %v342 = vpop.f32.mrf.mxu0
    %v343 = vadd.f32 %v113, %v342
    %344 = vmatprep.mubr.bf16.mxu0 0
    %345 = vmatmul.mubr.bf16.gmra.mxu0 %v170
    %v346 = vpop.f32.mrf.mxu0
    %v347 = vadd.f32 %v109, %v346
    %v348 = vpop.f32.mrf.mxu0
    %v349 = vadd.f32 %v113, %v348
    %v350 = vpop.f32.mrf.mxu0
    %v351 = vadd.f32 %v109, %v350
    %v352 = vpop.f32.mrf.mxu0
    %v353 = vadd.f32 %v113, %v352
    %354 = vmatprep.mubr.bf16.mxu0 0
    %355 = vmatmul.mubr.bf16.gmra.mxu0 %v171
    %v356 = vpop.f32.mrf.mxu0
    %v357 = vadd.f32 %v109, %v356
    %v358 = vpop.f32.mrf.mxu0
    %v359 = vadd.f32 %v113, %v358
    %v360 = vpop.f32.mrf.mxu0
    %v361 = vadd.f32 %v109, %v360
    %v362 = vpop.f32.mrf.mxu0
    %v363 = vadd.f32 %v113, %v362
    %364 = vmatprep.mubr.bf16.mxu0 0
    %365 = vmatmul.mubr.bf16.gmra.mxu0 %v172
    %v366 = vpop.f32.mrf.mxu0
    %v367 = vadd.f32 %v109, %v366
    %v368 = vpop.f32.mrf.mxu0
    %v369 = vadd.f32 %v113, %v368
    %v370 = vpop.f32.mrf.mxu0
    %v371 = vadd.f32 %v109, %v370
    %v372 = vpop.f32.mrf.mxu0
    %v373 = vadd.f32 %v113, %v372
    %374 = vmatprep.mubr.bf16.mxu0 0
    %375 = vmatmul.mubr.bf16.gmra.mxu0 %v173
    %v376 = vpop.f32.mrf.mxu0
    %v377 = vadd.f32 %v109, %v376
    %v378 = vpop.f32.mrf.mxu0
    %v379 = vadd.f32 %v113, %v378
    %v380 = vpop.f32.mrf.mxu0
    %v381 = vadd.f32 %v109, %v380
    %v382 = vpop.f32.mrf.mxu0
    %v383 = vadd.f32 %v113, %v382
    %384 = vmatprep.mubr.bf16.mxu0 0
    %385 = vmatmul.mubr.bf16.gmra.mxu0 %v174
    %v386 = vpop.f32.mrf.mxu0
    %v387 = vadd.f32 %v109, %v386
    %v388 = vpop.f32.mrf.mxu0
    %v389 = vadd.f32 %v113, %v388
    %v390 = vpop.f32.mrf.mxu0
    %v391 = vadd.f32 %v109, %v390
    %v392 = vpop.f32.mrf.mxu0
    %v393 = vadd.f32 %v113, %v392
    %394 = vmatprep.mubr.bf16.mxu0 0
    %395 = vmatmul.mubr.bf16.gmra.mxu0 %v175
    %v396 = vpop.f32.mrf.mxu0
    %v397 = vadd.f32 %v109, %v396
    %v398 = vpop.f32.mrf.mxu0
    %v399 = vadd.f32 %v113, %v398
    %v400 = vpop.f32.mrf.mxu0
    %v401 = vadd.f32 %v109, %v400
    %v402 = vpop.f32.mrf.mxu0
    %v403 = vadd.f32 %v113, %v402
    %404 = vmatprep.mubr.bf16.mxu0 0
    %405 = vmatmul.mubr.bf16.gmra.mxu0 %v176
    %v406 = vpop.f32.mrf.mxu0
    %v407 = vadd.f32 %v109, %v406
    %v408 = vpop.f32.mrf.mxu0
    %v409 = vadd.f32 %v113, %v408
    %v410 = vpop.f32.mrf.mxu0
    %v411 = vadd.f32 %v109, %v410
    %v412 = vpop.f32.mrf.mxu0
    %v413 = vadd.f32 %v113, %v412
    %414 = vmatprep.mubr.bf16.mxu0 0
    %415 = vmatmul.mubr.bf16.gmra.mxu0 %v177
    %v416 = vpop.f32.mrf.mxu0
    %v417 = vadd.f32 %v109, %v416
    %v418 = vpop.f32.mrf.mxu0
    %v419 = vadd.f32 %v113, %v418
    %v420 = vpop.f32.mrf.mxu0
    %v421 = vadd.f32 %v109, %v420
    %v422 = vpop.f32.mrf.mxu0
    %v423 = vadd.f32 %v113, %v422
    %424 = vmatprep.mubr.bf16.mxu0 0
    %425 = vmatmul.mubr.bf16.gmra.mxu0 %v178
    %v426 = vpop.f32.mrf.mxu0
    %v427 = vadd.f32 %v109, %v426
    %v428 = vpop.f32.mrf.mxu0
    %v429 = vadd.f32 %v113, %v428
    %v430 = vpop.f32.mrf.mxu0
    %v431 = vpop.f32.mrf.mxu0
    %432 = vdwg.mxu0
    %v433 = vmax.f32 %v307, 0.0
    %v434 = vmax.f32 %v309, 0.0
    %v435 = vmax.f32 %v311, 0.0
    %v436 = vmax.f32 %v313, 0.0
    %v437 = vmax.f32 %v317, 0.0
    %v438 = vmax.f32 %v319, 0.0
    %v439 = vmax.f32 %v321, 0.0
    %v440 = vmax.f32 %v323, 0.0
    %v441 = vmax.f32 %v327, 0.0
    %v442 = vmax.f32 %v329, 0.0
    %v443 = vmax.f32 %v331, 0.0
    %v444 = vmax.f32 %v333, 0.0
    %v445 = vmax.f32 %v337, 0.0
    %v446 = vmax.f32 %v339, 0.0
    %v447 = vmax.f32 %v341, 0.0
    %v448 = vmax.f32 %v343, 0.0
    %v449 = vmax.f32 %v347, 0.0
    %v450 = vmax.f32 %v349, 0.0
    %v451 = vmax.f32 %v351, 0.0
    %v452 = vmax.f32 %v353, 0.0
    %v453 = vmax.f32 %v357, 0.0
    %v454 = vmax.f32 %v359, 0.0
    %v455 = vmax.f32 %v361, 0.0
    %v456 = vmax.f32 %v363, 0.0
    %v457 = vmax.f32 %v367, 0.0
    %v458 = vmax.f32 %v369, 0.0
    %v459 = vmax.f32 %v371, 0.0
    %v460 = vmax.f32 %v373, 0.0
    %v461 = vmax.f32 %v377, 0.0
    %v462 = vmax.f32 %v379, 0.0
    %v463 = vmax.f32 %v381, 0.0
    %v464 = vmax.f32 %v383, 0.0
    %v465 = vmax.f32 %v387, 0.0
    %v466 = vmax.f32 %v389, 0.0
    %v467 = vmax.f32 %v391, 0.0
    %v468 = vmax.f32 %v393, 0.0
    %v469 = vmax.f32 %v397, 0.0
    %v470 = vmax.f32 %v399, 0.0
    %v471 = vmax.f32 %v401, 0.0
    %v472 = vmax.f32 %v403, 0.0
    %v473 = vmax.f32 %v407, 0.0
    %v474 = vmax.f32 %v409, 0.0
    %v475 = vmax.f32 %v411, 0.0
    %v476 = vmax.f32 %v413, 0.0
    %v477 = vmax.f32 %v417, 0.0
    %v478 = vmax.f32 %v419, 0.0
    %v479 = vmax.f32 %v421, 0.0
    %v480 = vmax.f32 %v423, 0.0
    %v481 = vmax.f32 %v427, 0.0
    %v482 = vmax.f32 %v429, 0.0
    %v483 = vmul.f32 %v433, %v434
    %v484 = vmul.f32 %v435, %v436
    %v485 = vmul.f32 %v437, %v438
    %v486 = vmul.f32 %v439, %v440
    %v487 = vmul.f32 %v441, %v442
    %v488 = vmul.f32 %v443, %v444
    %v489 = vmul.f32 %v445, %v446
    %v490 = vmul.f32 %v447, %v448
    %v491 = vmul.f32 %v449, %v450
    %v492 = vmul.f32 %v451, %v452
    %v493 = vmul.f32 %v453, %v454
    %v494 = vmul.f32 %v455, %v456
    %v495 = vmul.f32 %v457, %v458
    %v496 = vmul.f32 %v459, %v460
    %v497 = vmul.f32 %v461, %v462
    %v498 = vmul.f32 %v463, %v464
    %v499 = vmul.f32 %v465, %v466
    %v500 = vmul.f32 %v467, %v468
    %v501 = vmul.f32 %v469, %v470
    %v502 = vmul.f32 %v471, %v472
    %v503 = vmul.f32 %v473, %v474
    %v504 = vmul.f32 %v475, %v476
    %v505 = vmul.f32 %v477, %v478
    %v506 = vmul.f32 %v479, %v480
    %v507 = vmul.f32 %v481, %v482
    %508 = vadd.xlane.f32.xlu0 %v483
    %v509 = vpop.xlane.xlu0 %508
    %510 = vadd.xlane.f32.xlu0 %v484
    %v511 = vpop.xlane.xlu0 %510
    %512 = vadd.xlane.f32.xlu0 %v485
    %v513 = vpop.xlane.xlu0 %512
    %514 = vadd.xlane.f32.xlu0 %v486
    %v515 = vpop.xlane.xlu0 %514
    %516 = vadd.xlane.f32.xlu0 %v487
    %v517 = vpop.xlane.xlu0 %516
    %518 = vadd.xlane.f32.xlu0 %v488
    %v519 = vpop.xlane.xlu0 %518
    %520 = vadd.xlane.f32.xlu0 %v489
    %v521 = vpop.xlane.xlu0 %520
    %522 = vadd.xlane.f32.xlu0 %v490
    %v523 = vpop.xlane.xlu0 %522
    %524 = vadd.xlane.f32.xlu0 %v491
    %v525 = vpop.xlane.xlu0 %524
    %526 = vadd.xlane.f32.xlu0 %v492
    %v527 = vpop.xlane.xlu0 %526
    %528 = vadd.xlane.f32.xlu0 %v493
    %v529 = vpop.xlane.xlu0 %528
    %530 = vadd.xlane.f32.xlu0 %v494
    %v531 = vpop.xlane.xlu0 %530
    %532 = vadd.xlane.f32.xlu0 %v495
    %v533 = vpop.xlane.xlu0 %532
    %534 = vadd.xlane.f32.xlu0 %v496
    %v535 = vpop.xlane.xlu0 %534
    %536 = vadd.xlane.f32.xlu0 %v497
    %v537 = vpop.xlane.xlu0 %536
    %538 = vadd.xlane.f32.xlu0 %v498
    %v539 = vpop.xlane.xlu0 %538
    %540 = vadd.xlane.f32.xlu0 %v499
    %v541 = vpop.xlane.xlu0 %540
    %542 = vadd.xlane.f32.xlu0 %v500
    %v543 = vpop.xlane.xlu0 %542
    %544 = vadd.xlane.f32.xlu0 %v501
    %v545 = vpop.xlane.xlu0 %544
    %546 = vadd.xlane.f32.xlu0 %v502
    %v547 = vpop.xlane.xlu0 %546
    %548 = vadd.xlane.f32.xlu0 %v503
    %v549 = vpop.xlane.xlu0 %548
    %550 = vadd.xlane.f32.xlu0 %v504
    %v551 = vpop.xlane.xlu0 %550
    %552 = vadd.xlane.f32.xlu0 %v505
    %v553 = vpop.xlane.xlu0 %552
    %554 = vadd.xlane.f32.xlu0 %v506
    %v555 = vpop.xlane.xlu0 %554
    %556 = vadd.xlane.f32.xlu0 %v507
    %v557 = vpop.xlane.xlu0 %556
    %v558 = vmax.f32 %v509, 1e-24
    %v559 = vmax.f32 %v511, 1e-24
    %v560 = vmax.f32 %v513, 1e-24
    %v561 = vmax.f32 %v515, 1e-24
    %v562 = vmax.f32 %v517, 1e-24
    %v563 = vmax.f32 %v519, 1e-24
    %v564 = vmax.f32 %v521, 1e-24
    %v565 = vmax.f32 %v523, 1e-24
    %v566 = vmax.f32 %v525, 1e-24
    %v567 = vmax.f32 %v527, 1e-24
    %v568 = vmax.f32 %v529, 1e-24
    %v569 = vmax.f32 %v531, 1e-24
    %v570 = vmax.f32 %v533, 1e-24
    %v571 = vmax.f32 %v535, 1e-24
    %v572 = vmax.f32 %v537, 1e-24
    %v573 = vmax.f32 %v539, 1e-24
    %v574 = vmax.f32 %v541, 1e-24
    %v575 = vmax.f32 %v543, 1e-24
    %v576 = vmax.f32 %v545, 1e-24
    %v577 = vmax.f32 %v547, 1e-24
    %v578 = vmax.f32 %v549, 1e-24
    %v579 = vmax.f32 %v551, 1e-24
    %v580 = vmax.f32 %v553, 1e-24
    %v581 = vmax.f32 %v555, 1e-24
    %v582 = vmax.f32 %v557, 1e-24
    %v583 = vrsqrt.pop %v558
    %v584 = vrsqrt.pop %v559
    %v585 = vrsqrt.pop %v560
    %v586 = vrsqrt.pop %v561
    %v587 = vrsqrt.pop %v562
    %v588 = vrsqrt.pop %v563
    %v589 = vrsqrt.pop %v564
    %v590 = vrsqrt.pop %v565
    %v591 = vrsqrt.pop %v566
    %v592 = vrsqrt.pop %v567
    %v593 = vrsqrt.pop %v568
    %v594 = vrsqrt.pop %v569
    %v595 = vrsqrt.pop %v570
    %v596 = vrsqrt.pop %v571
    %v597 = vrsqrt.pop %v572
    %v598 = vrsqrt.pop %v573
    %v599 = vrsqrt.pop %v574
    %v600 = vrsqrt.pop %v575
    %v601 = vrsqrt.pop %v576
    %v602 = vrsqrt.pop %v577
    %v603 = vrsqrt.pop %v578
    %v604 = vrsqrt.pop %v579
    %v605 = vrsqrt.pop %v580
    %v606 = vrsqrt.pop %v581
    %v607 = vrsqrt.pop %v582
    %v608 = vrsqrt.pop %v483
    %v609 = vmul.f32 %v483, %v608
    %vm610 = vcmp.eq.f32.partialorder %v483, inf
    %v611 = vsel %vm610, %v483, %v609
    %vm612 = vcmp.eq.f32.partialorder %v483, 0.0
    %v613 = vand.u32 %v483, 2147483648
    %v614 = vsel %vm612, %v613, %v611
    %v615 = vrsqrt.pop %v484
    %v616 = vmul.f32 %v484, %v615
    %vm617 = vcmp.eq.f32.partialorder %v484, inf
    %v618 = vsel %vm617, %v484, %v616
    %vm619 = vcmp.eq.f32.partialorder %v484, 0.0
    %v620 = vand.u32 %v484, 2147483648
    %v621 = vsel %vm619, %v620, %v618
    %v622 = vrsqrt.pop %v485
    %v623 = vmul.f32 %v485, %v622
    %vm624 = vcmp.eq.f32.partialorder %v485, inf
    %v625 = vsel %vm624, %v485, %v623
    %vm626 = vcmp.eq.f32.partialorder %v485, 0.0
    %v627 = vand.u32 %v485, 2147483648
    %v628 = vsel %vm626, %v627, %v625
    %v629 = vrsqrt.pop %v486
    %v630 = vmul.f32 %v486, %v629
    %vm631 = vcmp.eq.f32.partialorder %v486, inf
    %v632 = vsel %vm631, %v486, %v630
    %vm633 = vcmp.eq.f32.partialorder %v486, 0.0
    %v634 = vand.u32 %v486, 2147483648
    %v635 = vsel %vm633, %v634, %v632
    %v636 = vrsqrt.pop %v487
    %v637 = vmul.f32 %v487, %v636
    %vm638 = vcmp.eq.f32.partialorder %v487, inf
    %v639 = vsel %vm638, %v487, %v637
    %vm640 = vcmp.eq.f32.partialorder %v487, 0.0
    %v641 = vand.u32 %v487, 2147483648
    %v642 = vsel %vm640, %v641, %v639
    %v643 = vrsqrt.pop %v488
    %v644 = vmul.f32 %v488, %v643
    %vm645 = vcmp.eq.f32.partialorder %v488, inf
    %v646 = vsel %vm645, %v488, %v644
    %vm647 = vcmp.eq.f32.partialorder %v488, 0.0
    %v648 = vand.u32 %v488, 2147483648
    %v649 = vsel %vm647, %v648, %v646
    %v650 = vrsqrt.pop %v489
    %v651 = vmul.f32 %v489, %v650
    %vm652 = vcmp.eq.f32.partialorder %v489, inf
    %v653 = vsel %vm652, %v489, %v651
    %vm654 = vcmp.eq.f32.partialorder %v489, 0.0
    %v655 = vand.u32 %v489, 2147483648
    %v656 = vsel %vm654, %v655, %v653
    %v657 = vrsqrt.pop %v490
    %v658 = vmul.f32 %v490, %v657
    %vm659 = vcmp.eq.f32.partialorder %v490, inf
    %v660 = vsel %vm659, %v490, %v658
    %vm661 = vcmp.eq.f32.partialorder %v490, 0.0
    %v662 = vand.u32 %v490, 2147483648
    %v663 = vsel %vm661, %v662, %v660
    %v664 = vrsqrt.pop %v491
    %v665 = vmul.f32 %v491, %v664
    %vm666 = vcmp.eq.f32.partialorder %v491, inf
    %v667 = vsel %vm666, %v491, %v665
    %vm668 = vcmp.eq.f32.partialorder %v491, 0.0
    %v669 = vand.u32 %v491, 2147483648
    %v670 = vsel %vm668, %v669, %v667
    %v671 = vrsqrt.pop %v492
    %v672 = vmul.f32 %v492, %v671
    %vm673 = vcmp.eq.f32.partialorder %v492, inf
    %v674 = vsel %vm673, %v492, %v672
    %vm675 = vcmp.eq.f32.partialorder %v492, 0.0
    %v676 = vand.u32 %v492, 2147483648
    %v677 = vsel %vm675, %v676, %v674
    %v678 = vrsqrt.pop %v493
    %v679 = vmul.f32 %v493, %v678
    %vm680 = vcmp.eq.f32.partialorder %v493, inf
    %v681 = vsel %vm680, %v493, %v679
    %vm682 = vcmp.eq.f32.partialorder %v493, 0.0
    %v683 = vand.u32 %v493, 2147483648
    %v684 = vsel %vm682, %v683, %v681
    %v685 = vrsqrt.pop %v494
    %v686 = vmul.f32 %v494, %v685
    %vm687 = vcmp.eq.f32.partialorder %v494, inf
    %v688 = vsel %vm687, %v494, %v686
    %vm689 = vcmp.eq.f32.partialorder %v494, 0.0
    %v690 = vand.u32 %v494, 2147483648
    %v691 = vsel %vm689, %v690, %v688
    %v692 = vrsqrt.pop %v495
    %v693 = vmul.f32 %v495, %v692
    %vm694 = vcmp.eq.f32.partialorder %v495, inf
    %v695 = vsel %vm694, %v495, %v693
    %vm696 = vcmp.eq.f32.partialorder %v495, 0.0
    %v697 = vand.u32 %v495, 2147483648
    %v698 = vsel %vm696, %v697, %v695
    %v699 = vrsqrt.pop %v496
    %v700 = vmul.f32 %v496, %v699
    %vm701 = vcmp.eq.f32.partialorder %v496, inf
    %v702 = vsel %vm701, %v496, %v700
    %vm703 = vcmp.eq.f32.partialorder %v496, 0.0
    %v704 = vand.u32 %v496, 2147483648
    %v705 = vsel %vm703, %v704, %v702
    %v706 = vrsqrt.pop %v497
    %v707 = vmul.f32 %v497, %v706
    %vm708 = vcmp.eq.f32.partialorder %v497, inf
    %v709 = vsel %vm708, %v497, %v707
    %vm710 = vcmp.eq.f32.partialorder %v497, 0.0
    %v711 = vand.u32 %v497, 2147483648
    %v712 = vsel %vm710, %v711, %v709
    %v713 = vrsqrt.pop %v498
    %v714 = vmul.f32 %v498, %v713
    %vm715 = vcmp.eq.f32.partialorder %v498, inf
    %v716 = vsel %vm715, %v498, %v714
    %vm717 = vcmp.eq.f32.partialorder %v498, 0.0
    %v718 = vand.u32 %v498, 2147483648
    %v719 = vsel %vm717, %v718, %v716
    %v720 = vrsqrt.pop %v499
    %v721 = vmul.f32 %v499, %v720
    %vm722 = vcmp.eq.f32.partialorder %v499, inf
    %v723 = vsel %vm722, %v499, %v721
    %vm724 = vcmp.eq.f32.partialorder %v499, 0.0
    %v725 = vand.u32 %v499, 2147483648
    %v726 = vsel %vm724, %v725, %v723
    %v727 = vrsqrt.pop %v500
    %v728 = vmul.f32 %v500, %v727
    %vm729 = vcmp.eq.f32.partialorder %v500, inf
    %v730 = vsel %vm729, %v500, %v728
    %vm731 = vcmp.eq.f32.partialorder %v500, 0.0
    %v732 = vand.u32 %v500, 2147483648
    %v733 = vsel %vm731, %v732, %v730
    %v734 = vrsqrt.pop %v501
    %v735 = vmul.f32 %v501, %v734
    %vm736 = vcmp.eq.f32.partialorder %v501, inf
    %v737 = vsel %vm736, %v501, %v735
    %vm738 = vcmp.eq.f32.partialorder %v501, 0.0
    %v739 = vand.u32 %v501, 2147483648
    %v740 = vsel %vm738, %v739, %v737
    %v741 = vrsqrt.pop %v502
    %v742 = vmul.f32 %v502, %v741
    %vm743 = vcmp.eq.f32.partialorder %v502, inf
    %v744 = vsel %vm743, %v502, %v742
    %vm745 = vcmp.eq.f32.partialorder %v502, 0.0
    %v746 = vand.u32 %v502, 2147483648
    %v747 = vsel %vm745, %v746, %v744
    %v748 = vrsqrt.pop %v503
    %v749 = vmul.f32 %v503, %v748
    %vm750 = vcmp.eq.f32.partialorder %v503, inf
    %v751 = vsel %vm750, %v503, %v749
    %vm752 = vcmp.eq.f32.partialorder %v503, 0.0
    %v753 = vand.u32 %v503, 2147483648
    %v754 = vsel %vm752, %v753, %v751
    %v755 = vrsqrt.pop %v504
    %v756 = vmul.f32 %v504, %v755
    %vm757 = vcmp.eq.f32.partialorder %v504, inf
    %v758 = vsel %vm757, %v504, %v756
    %vm759 = vcmp.eq.f32.partialorder %v504, 0.0
    %v760 = vand.u32 %v504, 2147483648
    %v761 = vsel %vm759, %v760, %v758
    %v762 = vrsqrt.pop %v505
    %v763 = vmul.f32 %v505, %v762
    %vm764 = vcmp.eq.f32.partialorder %v505, inf
    %v765 = vsel %vm764, %v505, %v763
    %vm766 = vcmp.eq.f32.partialorder %v505, 0.0
    %v767 = vand.u32 %v505, 2147483648
    %v768 = vsel %vm766, %v767, %v765
    %v769 = vrsqrt.pop %v506
    %v770 = vmul.f32 %v506, %v769
    %vm771 = vcmp.eq.f32.partialorder %v506, inf
    %v772 = vsel %vm771, %v506, %v770
    %vm773 = vcmp.eq.f32.partialorder %v506, 0.0
    %v774 = vand.u32 %v506, 2147483648
    %v775 = vsel %vm773, %v774, %v772
    %v776 = vrsqrt.pop %v507
    %v777 = vmul.f32 %v507, %v776
    %vm778 = vcmp.eq.f32.partialorder %v507, inf
    %v779 = vsel %vm778, %v507, %v777
    %vm780 = vcmp.eq.f32.partialorder %v507, 0.0
    %v781 = vand.u32 %v507, 2147483648
    %v782 = vsel %vm780, %v781, %v779
    %v783 = vmul.f32 %v614, %v583
    %v784 = vmul.f32 %v621, %v584
    %v785 = vmul.f32 %v628, %v585
    %v786 = vmul.f32 %v635, %v586
    %v787 = vmul.f32 %v642, %v587
    %v788 = vmul.f32 %v649, %v588
    %v789 = vmul.f32 %v656, %v589
    %v790 = vmul.f32 %v663, %v590
    %v791 = vmul.f32 %v670, %v591
    %v792 = vmul.f32 %v677, %v592
    %v793 = vmul.f32 %v684, %v593
    %v794 = vmul.f32 %v691, %v594
    %v795 = vmul.f32 %v698, %v595
    %v796 = vmul.f32 %v705, %v596
    %v797 = vmul.f32 %v712, %v597
    %v798 = vmul.f32 %v719, %v598
    %v799 = vmul.f32 %v726, %v599
    %v800 = vmul.f32 %v733, %v600
    %v801 = vmul.f32 %v740, %v601
    %v802 = vmul.f32 %v747, %v602
    %v803 = vmul.f32 %v754, %v603
    %v804 = vmul.f32 %v761, %v604
    %v805 = vmul.f32 %v768, %v605
    %v806 = vmul.f32 %v775, %v606
    %v807 = vmul.f32 %v782, %v607
    %v808 = vpack.c.bf16 %v784, %v783
    %v809 = vpack.c.bf16 %v786, %v785
    %v810 = vpack.c.bf16 %v788, %v787
    %v811 = vpack.c.bf16 %v790, %v789
    %v812 = vpack.c.bf16 %v792, %v791
    %v813 = vpack.c.bf16 %v794, %v793
    %v814 = vpack.c.bf16 %v796, %v795
    %v815 = vpack.c.bf16 %v798, %v797
    %v816 = vpack.c.bf16 %v800, %v799
    %v817 = vpack.c.bf16 %v802, %v801
    %v818 = vpack.c.bf16 %v804, %v803
    %v819 = vpack.c.bf16 %v806, %v805
    %v820 = vpack.c.bf16 %v807, %v807
    %v821 = vld [vmem:[#allocation7] sm:$0xf]
    %v822 = vld [vmem:[#allocation7 + $0x4] sm:$0xf]
    %v823 = vld [vmem:[#allocation7 + $0x8] sm:$0xf]
    %v824 = vld [vmem:[#allocation7 + $0xc] sm:$0xf]
    %v825 = vld [vmem:[#allocation7 + $0x10] sm:$0xf]
    %v826 = vld [vmem:[#allocation7 + $0x14] sm:$0xf]
    %v827 = vld [vmem:[#allocation7 + $0x18] sm:$0xf]
    %v828 = vld [vmem:[#allocation7 + $0x1c] sm:$0xf]
    %v829 = vld [vmem:[#allocation7 + $0x20] sm:$0xf]
    %v830 = vld [vmem:[#allocation7 + $0x24] sm:$0xf]
    %v831 = vld [vmem:[#allocation7 + $0x28] sm:$0xf]
    %v832 = vld [vmem:[#allocation7 + $0x2c] sm:$0xf]
    %v833 = vld [vmem:[#allocation7 + $0x30] sm:$0xf]
    %v834 = vld [vmem:[#allocation7 + $0x34] sm:$0xf]
    %v835 = vld [vmem:[#allocation7 + $0x38] sm:$0xf]
    %v836 = vld [vmem:[#allocation7 + $0x3c] sm:$0xf]
    %v837 = vld [vmem:[%s4] sm:$0x1]
    %v839 = vlaneseq
    %v840 = vshrl.u32 %v839, 7
    %v841 = vsub.s32 0, %v840
    %v842 = vrot.slane %v837, %v841
    %v860 = vunpack.c.l.b16 %v821
    %v861 = vunpack.c.l.b16 %v822
    %v862 = vunpack.c.l.b16 %v823
    %v863 = vunpack.c.l.b16 %v824
    %v864 = vunpack.c.l.b16 %v825
    %v865 = vunpack.c.l.b16 %v826
    %v866 = vunpack.c.l.b16 %v827
    %v867 = vunpack.c.l.b16 %v828
    %v868 = vunpack.c.l.b16 %v829
    %v869 = vunpack.c.l.b16 %v830
    %v870 = vunpack.c.l.b16 %v831
    %v871 = vunpack.c.l.b16 %v832
    %v872 = vunpack.c.l.b16 %v833
    %v873 = vunpack.c.l.b16 %v834
    %v874 = vunpack.c.l.b16 %v835
    %v875 = vunpack.c.l.b16 %v836
    %v876 = vpack.c.b16 %v861, %v860
    %v877 = vpack.c.b16 %v863, %v862
    %v878 = vpack.c.b16 %v865, %v864
    %v879 = vpack.c.b16 %v867, %v866
    %v880 = vpack.c.b16 %v869, %v868
    %v881 = vpack.c.b16 %v871, %v870
    %v882 = vpack.c.b16 %v873, %v872
    %v883 = vpack.c.b16 %v875, %v874
    %892 = vmatprep.subr.bf16.mxu0 0
    %893 = vmatpush1.bf16.msra.mxu0 %v883
    %894 = vmatprep.subr.bf16.mxu0 0
    %895 = vmatpush1.bf16.msra.mxu0 %v882
    %896 = vmatprep.subr.bf16.mxu0 0
    %897 = vmatpush1.bf16.msra.mxu0 %v881
    %898 = vmatprep.subr.bf16.mxu0 0
    %899 = vmatpush1.bf16.msra.mxu0 %v880
    %900 = vmatprep.subr.bf16.mxu0 0
    %901 = vmatpush1.bf16.msra.mxu0 %v879
    %902 = vmatprep.subr.bf16.mxu0 0
    %903 = vmatpush1.bf16.msra.mxu0 %v878
    %904 = vmatprep.subr.bf16.mxu0 0
    %905 = vmatpush1.bf16.msra.mxu0 %v877
    %906 = vmatprep.subr.bf16.mxu0 0
    %907 = vmatpush1.bf16.msra.mxu0 %v876
    %908 = vmatprep.subr.bf16.mxu0 0
    %909 = vmatpush2.bf16.msra.mxu0 0
    %910 = vmatprep.subr.bf16.mxu0 0
    %911 = vmatpush2.bf16.msra.mxu0 0
    %912 = vmatprep.subr.bf16.mxu0 0
    %913 = vmatpush2.bf16.msra.mxu0 0
    %914 = vmatprep.subr.bf16.mxu0 0
    %915 = vmatpush2.bf16.msra.mxu0 0
    %916 = vmatprep.subr.bf16.mxu0 0
    %917 = vmatpush2.bf16.msra.mxu0 0
    %918 = vmatprep.subr.bf16.mxu0 0
    %919 = vmatpush2.bf16.msra.mxu0 0
    %920 = vmatprep.subr.bf16.mxu0 0
    %921 = vmatpush2.bf16.msra.mxu0 0
    %922 = vmatprep.subr.bf16.mxu0 0
    %923 = vmatpush2.bf16.msra.mxu0 0
    %924 = vmatprep.mubr.bf16.mxu0 0
    %925 = vmatmul.mubr.bf16.gmra.mxu0 %v808
    %v926 = vpop.f32.mrf.mxu0
    %v927 = vadd.f32 %v842, %v926
    %v928 = vpop.f32.mrf.mxu0
    %v929 = vpop.f32.mrf.mxu0
    %v930 = vadd.f32 %v842, %v929
    %v931 = vpop.f32.mrf.mxu0
    %932 = vmatprep.mubr.bf16.mxu0 0
    %933 = vmatmul.mubr.bf16.gmra.mxu0 %v809
    %v934 = vpop.f32.mrf.mxu0
    %v935 = vadd.f32 %v842, %v934
    %v936 = vpop.f32.mrf.mxu0
    %v937 = vpop.f32.mrf.mxu0
    %v938 = vadd.f32 %v842, %v937
    %v939 = vpop.f32.mrf.mxu0
    %940 = vmatprep.mubr.bf16.mxu0 0
    %941 = vmatmul.mubr.bf16.gmra.mxu0 %v810
    %v942 = vpop.f32.mrf.mxu0
    %v943 = vadd.f32 %v842, %v942
    %v944 = vpop.f32.mrf.mxu0
    %v945 = vpop.f32.mrf.mxu0
    %v946 = vadd.f32 %v842, %v945
    %v947 = vpop.f32.mrf.mxu0
    %948 = vmatprep.mubr.bf16.mxu0 0
    %949 = vmatmul.mubr.bf16.gmra.mxu0 %v811
    %v950 = vpop.f32.mrf.mxu0
    %v951 = vadd.f32 %v842, %v950
    %v952 = vpop.f32.mrf.mxu0
    %v953 = vpop.f32.mrf.mxu0
    %v954 = vadd.f32 %v842, %v953
    %v955 = vpop.f32.mrf.mxu0
    %956 = vmatprep.mubr.bf16.mxu0 0
    %957 = vmatmul.mubr.bf16.gmra.mxu0 %v812
    %v958 = vpop.f32.mrf.mxu0
    %v959 = vadd.f32 %v842, %v958
    %v960 = vpop.f32.mrf.mxu0
    %v961 = vpop.f32.mrf.mxu0
    %v962 = vadd.f32 %v842, %v961
    %v963 = vpop.f32.mrf.mxu0
    %964 = vmatprep.mubr.bf16.mxu0 0
    %965 = vmatmul.mubr.bf16.gmra.mxu0 %v813
    %v966 = vpop.f32.mrf.mxu0
    %v967 = vadd.f32 %v842, %v966
    %v968 = vpop.f32.mrf.mxu0
    %v969 = vpop.f32.mrf.mxu0
    %v970 = vadd.f32 %v842, %v969
    %v971 = vpop.f32.mrf.mxu0
    %972 = vmatprep.mubr.bf16.mxu0 0
    %973 = vmatmul.mubr.bf16.gmra.mxu0 %v814
    %v974 = vpop.f32.mrf.mxu0
    %v975 = vadd.f32 %v842, %v974
    %v976 = vpop.f32.mrf.mxu0
    %v977 = vpop.f32.mrf.mxu0
    %v978 = vadd.f32 %v842, %v977
    %v979 = vpop.f32.mrf.mxu0
    %980 = vmatprep.mubr.bf16.mxu0 0
    %981 = vmatmul.mubr.bf16.gmra.mxu0 %v815
    %v982 = vpop.f32.mrf.mxu0
    %v983 = vadd.f32 %v842, %v982
    %v984 = vpop.f32.mrf.mxu0
    %v985 = vpop.f32.mrf.mxu0
    %v986 = vadd.f32 %v842, %v985
    %v987 = vpop.f32.mrf.mxu0
    %988 = vmatprep.mubr.bf16.mxu0 0
    %989 = vmatmul.mubr.bf16.gmra.mxu0 %v816
    %v990 = vpop.f32.mrf.mxu0
    %v991 = vadd.f32 %v842, %v990
    %v992 = vpop.f32.mrf.mxu0
    %v993 = vpop.f32.mrf.mxu0
    %v994 = vadd.f32 %v842, %v993
    %v995 = vpop.f32.mrf.mxu0
    %996 = vmatprep.mubr.bf16.mxu0 0
    %997 = vmatmul.mubr.bf16.gmra.mxu0 %v817
    %v998 = vpop.f32.mrf.mxu0
    %v999 = vadd.f32 %v842, %v998
    %v1000 = vpop.f32.mrf.mxu0
    %v1001 = vpop.f32.mrf.mxu0
    %v1002 = vadd.f32 %v842, %v1001
    %v1003 = vpop.f32.mrf.mxu0
    %1004 = vmatprep.mubr.bf16.mxu0 0
    %1005 = vmatmul.mubr.bf16.gmra.mxu0 %v818
    %v1006 = vpop.f32.mrf.mxu0
    %v1007 = vadd.f32 %v842, %v1006
    %v1008 = vpop.f32.mrf.mxu0
    %v1009 = vpop.f32.mrf.mxu0
    %v1010 = vadd.f32 %v842, %v1009
    %v1011 = vpop.f32.mrf.mxu0
    %1012 = vmatprep.mubr.bf16.mxu0 0
    %1013 = vmatmul.mubr.bf16.gmra.mxu0 %v819
    %v1014 = vpop.f32.mrf.mxu0
    %v1015 = vadd.f32 %v842, %v1014
    %v1016 = vpop.f32.mrf.mxu0
    %v1017 = vpop.f32.mrf.mxu0
    %v1018 = vadd.f32 %v842, %v1017
    %v1019 = vpop.f32.mrf.mxu0
    %1020 = vmatprep.mubr.bf16.mxu0 0
    %1021 = vmatmul.mubr.bf16.gmra.mxu0 %v820
    %v1022 = vpop.f32.mrf.mxu0
    %v1023 = vadd.f32 %v842, %v1022
    %v1024 = vpop.f32.mrf.mxu0
    %v1025 = vpop.f32.mrf.mxu0
    %v1026 = vpop.f32.mrf.mxu0
    %1027 = vdwg.mxu0
    %v1028 = vmax.f32 %v927, 0.0
    %v1029 = vmax.f32 %v930, 0.0
    %v1030 = vmax.f32 %v935, 0.0
    %v1031 = vmax.f32 %v938, 0.0
    %v1032 = vmax.f32 %v943, 0.0
    %v1033 = vmax.f32 %v946, 0.0
    %v1034 = vmax.f32 %v951, 0.0
    %v1035 = vmax.f32 %v954, 0.0
    %v1036 = vmax.f32 %v959, 0.0
    %v1037 = vmax.f32 %v962, 0.0
    %v1038 = vmax.f32 %v967, 0.0
    %v1039 = vmax.f32 %v970, 0.0
    %v1040 = vmax.f32 %v975, 0.0
    %v1041 = vmax.f32 %v978, 0.0
    %v1042 = vmax.f32 %v983, 0.0
    %v1043 = vmax.f32 %v986, 0.0
    %v1044 = vmax.f32 %v991, 0.0
    %v1045 = vmax.f32 %v994, 0.0
    %v1046 = vmax.f32 %v999, 0.0
    %v1047 = vmax.f32 %v1002, 0.0
    %v1048 = vmax.f32 %v1007, 0.0
    %v1049 = vmax.f32 %v1010, 0.0
    %v1050 = vmax.f32 %v1015, 0.0
    %v1051 = vmax.f32 %v1018, 0.0
    %v1052 = vmax.f32 %v1023, 0.0
    %1053 = vst [vmem:[#allocation8] sm:$0xff] %v1028
    %1054 = vst [vmem:[#allocation8 + $0x8] sm:$0xff] %v1029
    %1055 = vst [vmem:[#allocation8 + $0x10] sm:$0xff] %v1030
    %1056 = vst [vmem:[#allocation8 + $0x18] sm:$0xff] %v1031
    %1057 = vst [vmem:[#allocation8 + $0x20] sm:$0xff] %v1032
    %1058 = vst [vmem:[#allocation8 + $0x28] sm:$0xff] %v1033
    %1059 = vst [vmem:[#allocation8 + $0x30] sm:$0xff] %v1034
    %1060 = vst [vmem:[#allocation8 + $0x38] sm:$0xff] %v1035
    %1061 = vst [vmem:[#allocation8 + $0x40] sm:$0xff] %v1036
    %1062 = vst [vmem:[#allocation8 + $0x48] sm:$0xff] %v1037
    %1063 = vst [vmem:[#allocation8 + $0x50] sm:$0xff] %v1038
    %1064 = vst [vmem:[#allocation8 + $0x58] sm:$0xff] %v1039
    %1065 = vst [vmem:[#allocation8 + $0x60] sm:$0xff] %v1040
    %1066 = vst [vmem:[#allocation8 + $0x68] sm:$0xff] %v1041
    %1067 = vst [vmem:[#allocation8 + $0x70] sm:$0xff] %v1042
    %1068 = vst [vmem:[#allocation8 + $0x78] sm:$0xff] %v1043
    %1069 = vst [vmem:[#allocation8 + $0x80] sm:$0xff] %v1044
    %1070 = vst [vmem:[#allocation8 + $0x88] sm:$0xff] %v1045
    %1071 = vst [vmem:[#allocation8 + $0x90] sm:$0xff] %v1046
    %1072 = vst [vmem:[#allocation8 + $0x98] sm:$0xff] %v1047
    %1073 = vst [vmem:[#allocation8 + $0xa0] sm:$0xff] %v1048
    %1074 = vst [vmem:[#allocation8 + $0xa8] sm:$0xff] %v1049
    %1075 = vst [vmem:[#allocation8 + $0xb0] sm:$0xff] %v1050
    %1076 = vst [vmem:[#allocation8 + $0xb8] sm:$0xff] %v1051
    %1077 = vst [vmem:[#allocation8 + $0xc0] sm:$0xff] %v1052
    // Predicated region
    $region34: #{tpu_custom_call.1} parent=1 // pred_check
      _
    $region35: #{tpu_custom_call.1} parent=1 // pred_check_branch
      %1079 = sbr.rel (0) target = $region37
    $region36: #{tpu_custom_call.1} parent=1 // pred_region
      %s1081 = ssub.s32 3200, 3200
      %1082 = vsyncadd [#allocation4], %s1081
      %s1083 = sshll.u32 [#allocation8], 4
      %s1084 = int_to_ptr.vmem [resolvable:$true] %s1083
      %1089 = dma.vmem_to_hbm [thread:$0]  %s1084, 3200, %s5, [#allocation4], 128, 128, 8
    $region37: #{tpu_custom_call.1} parent=1 // pred_fallthru
      _
    // Predicated region
    $region38: #{tpu_custom_call.1} parent=1 // pred_check
      _
    $region39: #{tpu_custom_call.1} parent=1 // pred_check_branch
      %1091 = sbr.rel (0) target = $region41
    $region40: #{tpu_custom_call.1} parent=1 // pred_region
      %1092 = dma.done [#allocation4], 3200
    $region41: #{tpu_custom_call.1} parent=1 // pred_fallthru
      _
    %1093 = vsyncpa [#allocation3], 1
    %1094 = vsyncpa [#allocation6], 1
    %1095 = vsyncpa [#allocation4], 1

</llo_original>
